<compile_context>
chip_gen: v5e
topology: v5e:2x2
jax: 0.10.0
libtpu: 0.0.40
codegen_flags: <defaults>
</compile_context>

<pallas_src>
import math

import jax
import jax.numpy as jnp
from jax.experimental import pallas as pl
from jax.experimental.pallas import tpu as pltpu


def _fused_gcn_kernel(a_ref, x_ref, w_ref, b_ref, h_ref, xw_ref, acc_ref):
    """One fused kernel for all GCN layers.

    a_ref  : (tile_m, tile_k) bf16 tile of the normalized adjacency A_hat
    x_ref  : (N_pad, C_pad)  f32  padded input node features (whole, resident)
    w_ref  : (1, C_pad, C_pad) f32 weight of the current layer
    b_ref  : (1, 1, C_pad)   f32  bias of the current layer
    h_ref  : (N_pad, C_pad)  f32  OUTPUT block, constant index map -> acts as
                                  the resident node-feature state across layers
    xw_ref : (N_pad, C_pad)  bf16 scratch holding H @ W_l for the current layer
    acc_ref: (tile_m, C_pad) f32  row-tile accumulator for A_hat @ XW
    """
    l = pl.program_id(0)          # layer
    i = pl.program_id(1)          # row tile of A_hat / output rows
    k = pl.program_id(2)          # reduction tile (columns of A_hat)
    num_layers = pl.num_programs(0)
    nk = pl.num_programs(2)
    tile_m, tile_k = a_ref.shape

    # Seed the resident feature state with the (padded) input features.
    @pl.when((l == 0) & (i == 0) & (k == 0))
    def _():
        h_ref[...] = x_ref[...]

    # Once per layer: project the full node-feature state through W_l on the
    # MXU; store in bf16 so the big aggregation streams bf16 operands.
    @pl.when((i == 0) & (k == 0))
    def _():
        xw = jnp.dot(h_ref[...], w_ref[0], preferred_element_type=jnp.float32)
        xw_ref[...] = xw.astype(xw_ref.dtype)

    # Tiled aggregation: acc(i) += A_hat[i, k] @ XW[k]   (f32 accumulation).
    @pl.when(k == 0)
    def _():
        acc_ref[...] = jnp.zeros_like(acc_ref)

    k_off = pl.multiple_of(k * tile_k, tile_k)
    acc_ref[...] += jnp.dot(
        a_ref[...],
        xw_ref[pl.ds(k_off, tile_k), :],
        preferred_element_type=jnp.float32,
    )

    # Finalize the row tile: add bias, ReLU on all but the last layer, and
    # write it back into the resident feature state (== the kernel output).
    @pl.when(k == nk - 1)
    def _():
        h = acc_ref[...] + b_ref[0]
        is_last = l == num_layers - 1
        h = jnp.where(is_last, h, jnp.maximum(h, 0.0))
        row_off = pl.multiple_of(i * tile_m, tile_m)
        h_ref[pl.ds(row_off, tile_m), :] = h.astype(h_ref.dtype)


def normalized_adjacency(edge_index, num_nodes):
    """Dense D^{-1/2} (A + I) D^{-1/2} from a (2, E) edge_index (JAX glue).

    Duplicate edges are deduplicated (set, not add) and the diagonal is SET to
    one (so a pre-existing self loop does not become weight 2).
    """
    src = edge_index[0]
    dst = edge_index[1]
    a = jnp.zeros((num_nodes, num_nodes), jnp.float32)
    # message flows src -> dst (row = dst, col = src), like PyG's GCNConv
    a = a.at[dst, src].set(1.0)
    diag = jnp.arange(num_nodes)
    a = a.at[diag, diag].set(1.0)  # self loops
    deg = a.sum(axis=1)
    d_inv_sqrt = jnp.where(deg > 0, 1.0 / jnp.sqrt(deg), 0.0)
    return d_inv_sqrt[:, None] * a * d_inv_sqrt[None, :]


def _round_up(x, m):
    return ((x + m - 1) // m) * m


def gcn_forward(x, edge_index, params, *, tile_m=128, tile_k=128):
    """x: (N, C_in) float32, edge_index: (2, E) int32, params: [(W, b), ...]."""
    n, c_in = x.shape
    num_layers = len(params)
    out_c = params[-1][0].shape[1]

    # Pad channels to a lane-dense multiple of 128 and N to the tile sizes.
    dims = [c_in] + [w.shape[1] for (w, _) in params]
    c_pad = _round_up(max(dims), 128)
    n_pad = _round_up(n, math.lcm(tile_m, tile_k))

    # Dense normalized adjacency, cast to bf16 (dominant HBM stream) + pad.
    a_hat = normalized_adjacency(edge_index, n)
    a_pad = (
        jnp.zeros((n_pad, n_pad), jnp.bfloat16)
        .at[:n, :n]
        .set(a_hat.astype(jnp.bfloat16))
    )
    x_pad = jnp.zeros((n_pad, c_pad), jnp.float32).at[:n, :c_in].set(x)

    # Stack per-layer weights/biases so one pallas_call covers every layer.
    w_stack = jnp.zeros((num_layers, c_pad, c_pad), jnp.float32)
    b_stack = jnp.zeros((num_layers, 1, c_pad), jnp.float32)
    for li, (w, b) in enumerate(params):
        fi, fo = w.shape
        w_stack = w_stack.at[li, :fi, :fo].set(w)
        b_stack = b_stack.at[li, 0, :fo].set(b)

    grid = (num_layers, n_pad // tile_m, n_pad // tile_k)

    flops = num_layers * (2 * n_pad * n_pad * c_pad + 2 * n_pad * c_pad * c_pad)
    bytes_accessed = (
        a_pad.size * 2
        + x_pad.size * 4
        + w_stack.size * 4
        + b_stack.size * 4
        + n_pad * c_pad * 4
    )

    out_pad = pl.pallas_call(
        _fused_gcn_kernel,
        out_shape=jax.ShapeDtypeStruct((n_pad, c_pad), jnp.float32),
        grid_spec=pltpu.PrefetchScalarGridSpec(
            num_scalar_prefetch=0,
            grid=grid,
            in_specs=[
                # A_hat streamed tile-by-tile (bf16).
                pl.BlockSpec((tile_m, tile_k), lambda l, i, k: (i, k)),
                # Input features: whole array, resident (needed only at step 0).
                pl.BlockSpec((n_pad, c_pad), lambda l, i, k: (0, 0)),
                # Per-layer weight / bias.
                pl.BlockSpec((1, c_pad, c_pad), lambda l, i, k: (l, 0, 0)),
                pl.BlockSpec((1, 1, c_pad), lambda l, i, k: (l, 0, 0)),
            ],
            # Output block index never changes -> stays resident in VMEM and is
            # written back to HBM once at the very end (doubles as layer state).
            out_specs=pl.BlockSpec((n_pad, c_pad), lambda l, i, k: (0, 0)),
            scratch_shapes=[
                pltpu.VMEM((n_pad, c_pad), jnp.bfloat16),   # XW of current layer
                pltpu.VMEM((tile_m, c_pad), jnp.float32),   # row-tile accumulator
            ],
        ),
        compiler_params=pltpu.CompilerParams(
            # Fused layer loop carries a sequential dependency through the
            # resident H state -> every axis must stay "arbitrary".
            dimension_semantics=("arbitrary", "arbitrary", "arbitrary"),
            vmem_limit_bytes=48 * 1024 * 1024,
        ),
        cost_estimate=pl.CostEstimate(
            flops=flops, transcendentals=0, bytes_accessed=bytes_accessed
        ),
    )(a_pad, x_pad, w_stack, b_stack)

    return out_pad[:n, :out_c]


def gcn_forward_ref(x, edge_index, params):
    """Pure-JAX f32 reference with identical semantics."""
    a_hat = normalized_adjacency(edge_index, x.shape[0])
    h = x
    for w, b in params[:-1]:
        h = jnp.maximum(a_hat @ (h @ w) + b, 0.0)
    w, b = params[-1]
    return a_hat @ (h @ w) + b


def init_gcn_params(key, in_channels, hidden_channels, out_channels, num_layers):
    dims = [in_channels] + [hidden_channels] * (num_layers - 1) + [out_channels]
    params = []
    for li in range(num_layers):
        key, wk = jax.random.split(key)
        fan_in, fan_out = dims[li], dims[li + 1]
        scale = jnp.sqrt(2.0 / (fan_in + fan_out))
        w = scale * jax.random.normal(wk, (fan_in, fan_out), jnp.float32)
        b = jnp.zeros((fan_out,), jnp.float32)
        params.append((w, b))
    return params


if __name__ == "__main__":
    key = jax.random.PRNGKey(0)
    k_feat, k_edge, k_param = jax.random.split(key, 3)

    num_nodes = 200
    num_edges = 800
    in_channels = 8
    hidden_channels = 32
    out_channels = 4
    num_layers = 3

    x = jax.random.normal(k_feat, (num_nodes, in_channels), jnp.float32)
    edge_index = jax.random.randint(
        k_edge, (2, num_edges), minval=0, maxval=num_nodes, dtype=jnp.int32
    )
    params = init_gcn_params(
        k_param, in_channels, hidden_channels, out_channels, num_layers
    )

    fwd = jax.jit(gcn_forward)
    out = jax.block_until_ready(fwd(x, edge_index, params))

    ref = gcn_forward_ref(x, edge_index, params)
    assert out.shape == (num_nodes, out_channels)
    # bf16 A_hat / XW stream with f32 accumulation over 3 layers -> allow a
    # small absolute + relative slack vs the pure-f32 reference.
    max_err = float(jnp.max(jnp.abs(out - ref)))
    scale = max(float(jnp.max(jnp.abs(ref))), 1.0)
    assert max_err <= 1e-2 + 2e-2 * scale, (max_err, scale)

    print("KERNEL_OK")
</pallas_src>

<mosaic_0001>
module attributes {stable_mosaic.version = 11 : i64} {
  func.func @_fused_gcn_kernel(%arg0: i32, %arg1: i32, %arg2: i32, %arg3: memref<128x128xbf16, #tpu.memory_space<vmem>>, %arg4: memref<256x128xf32, #tpu.memory_space<vmem>>, %arg5: memref<1x128x128xf32, #tpu.memory_space<vmem>>, %arg6: memref<1x1x128xf32, #tpu.memory_space<vmem>>, %arg7: memref<256x128xf32, #tpu.memory_space<vmem>>, %arg8: memref<256x128xbf16, #tpu.memory_space<vmem>>, %arg9: memref<128x128xf32, #tpu.memory_space<vmem>>) attributes {dimension_semantics = [#tpu.dimension_semantics<arbitrary>, #tpu.dimension_semantics<arbitrary>, #tpu.dimension_semantics<arbitrary>], iteration_bounds = array<i64: 3, 2, 2>, scalar_prefetch = 0 : i64, scratch_operands = 2 : i64, tpu.core_type = #tpu.core_type<tc>, window_params = [{transform_indices = @transform_0, window_bounds = array<i64: 128, 128>}, {pipeline_mode = #tpu.pipeline_mode<synchronous>, transform_indices = @transform_1, window_bounds = array<i64: 256, 128>}, {transform_indices = @transform_2, window_bounds = array<i64: 1, 128, 128>}, {transform_indices = @transform_3, window_bounds = array<i64: 1, 1, 128>}, {pipeline_mode = #tpu.pipeline_mode<synchronous>, transform_indices = @transform_4, window_bounds = array<i64: 256, 128>}]} {
    %c0_i32 = arith.constant 0 : i32
    %0 = arith.cmpi eq, %arg0, %c0_i32 : i32
    %c0_i32_0 = arith.constant 0 : i32
    %1 = arith.cmpi eq, %arg1, %c0_i32_0 : i32
    %2 = arith.andi %0, %1 : i1
    %c0_i32_1 = arith.constant 0 : i32
    %3 = arith.cmpi eq, %arg2, %c0_i32_1 : i32
    %4 = arith.andi %2, %3 : i1
    %5 = arith.extui %4 : i1 to i32
    %c0_i32_2 = arith.constant 0 : i32
    %6 = arith.cmpi ne, %5, %c0_i32_2 : i32
    scf.if %6 {
      %c0_15 = arith.constant 0 : index
      %c0_16 = arith.constant 0 : index
      %27 = vector.load %arg4[%c0_15, %c0_16] : memref<256x128xf32, #tpu.memory_space<vmem>>, vector<256x128xf32>
      %c0_17 = arith.constant 0 : index
      %c0_18 = arith.constant 0 : index
      %28 = vector.load %arg7[%c0_17, %c0_18] : memref<256x128xf32, #tpu.memory_space<vmem>>, vector<256x128xf32>
      tpu.vector_store %arg7[%c0_17, %c0_18], %27 {strides = array<i32>} : memref<256x128xf32, #tpu.memory_space<vmem>>, vector<256x128xf32>,
    } else {
    }
    %c0_i32_3 = arith.constant 0 : i32
    %7 = arith.cmpi eq, %arg1, %c0_i32_3 : i32
    %c0_i32_4 = arith.constant 0 : i32
    %8 = arith.cmpi eq, %arg2, %c0_i32_4 : i32
    %9 = arith.andi %7, %8 : i1
    %10 = arith.extui %9 : i1 to i32
    %c0_i32_5 = arith.constant 0 : i32
    %11 = arith.cmpi ne, %10, %c0_i32_5 : i32
    scf.if %11 {
      %c0_15 = arith.constant 0 : index
      %c0_16 = arith.constant 0 : index
      %27 = vector.load %arg7[%c0_15, %c0_16] : memref<256x128xf32, #tpu.memory_space<vmem>>, vector<256x128xf32>
      %c0_17 = arith.constant 0 : index
      %c0_18 = arith.constant 0 : index
      %c0_19 = arith.constant 0 : index
      %28 = vector.load %arg5[%c0_17, %c0_18, %c0_19] : memref<1x128x128xf32, #tpu.memory_space<vmem>>, vector<1x128x128xf32>
      %29 = vector.shape_cast %28 : vector<1x128x128xf32> to vector<128x128xf32>
      %cst_20 = arith.constant dense<0.000000e+00> : vector<256x128xf32>
      %30 = tpu.matmul %27, %29, %cst_20 {dimension_numbers = #tpu.dot_dimension_numbers<[1], [0], [0], [1], [0, 0, 1, 1], [], []>} : vector<256x128xf32>, vector<128x128xf32>, vector<256x128xf32> -> vector<256x128xf32>
      %31 = arith.truncf %30 : vector<256x128xf32> to vector<256x128xbf16>
      %c0_21 = arith.constant 0 : index
      %c0_22 = arith.constant 0 : index
      %32 = vector.load %arg8[%c0_21, %c0_22] : memref<256x128xbf16, #tpu.memory_space<vmem>>, vector<256x128xbf16>
      tpu.vector_store %arg8[%c0_21, %c0_22], %31 {strides = array<i32>} : memref<256x128xbf16, #tpu.memory_space<vmem>>, vector<256x128xbf16>,
    } else {
    }
    %c0_i32_6 = arith.constant 0 : i32
    %12 = arith.cmpi eq, %arg2, %c0_i32_6 : i32
    %13 = arith.extui %12 : i1 to i32
    %c0_i32_7 = arith.constant 0 : i32
    %14 = arith.cmpi ne, %13, %c0_i32_7 : i32
    scf.if %14 {
      %cst_15 = arith.constant 0.000000e+00 : f32
      %27 = vector.broadcast %cst_15 : f32 to vector<128x128xf32>
      %c0_16 = arith.constant 0 : index
      %c0_17 = arith.constant 0 : index
      %28 = vector.load %arg9[%c0_16, %c0_17] : memref<128x128xf32, #tpu.memory_space<vmem>>, vector<128x128xf32>
      tpu.vector_store %arg9[%c0_16, %c0_17], %27 {strides = array<i32>} : memref<128x128xf32, #tpu.memory_space<vmem>>, vector<128x128xf32>,
    } else {
    }
    %c128_i32 = arith.constant 128 : i32
    %15 = arith.muli %arg2, %c128_i32 : i32
    %16 = tpu.assume_multiple %15, 128 : i32
    %c0 = arith.constant 0 : index
    %c0_8 = arith.constant 0 : index
    %17 = vector.load %arg9[%c0, %c0_8] : memref<128x128xf32, #tpu.memory_space<vmem>>, vector<128x128xf32>
    %c0_9 = arith.constant 0 : index
    %c0_10 = arith.constant 0 : index
    %18 = vector.load %arg3[%c0_9, %c0_10] : memref<128x128xbf16, #tpu.memory_space<vmem>>, vector<128x128xbf16>
    %19 = arith.index_cast %16 : i32 to index
    %c0_11 = arith.constant 0 : index
    %20 = vector.load %arg8[%19, %c0_11] : memref<256x128xbf16, #tpu.memory_space<vmem>>, vector<128x128xbf16>
    %cst = arith.constant dense<0.000000e+00> : vector<128x128xf32>
    %21 = tpu.matmul %18, %20, %cst {dimension_numbers = #tpu.dot_dimension_numbers<[1], [0], [0], [1], [0, 0, 1, 1], [], []>} : vector<128x128xbf16>, vector<128x128xbf16>, vector<128x128xf32> -> vector<128x128xf32>
    %22 = arith.addf %17, %21 : vector<128x128xf32>
    %c0_12 = arith.constant 0 : index
    %c0_13 = arith.constant 0 : index
    %23 = vector.load %arg9[%c0_12, %c0_13] : memref<128x128xf32, #tpu.memory_space<vmem>>, vector<128x128xf32>
    tpu.vector_store %arg9[%c0_12, %c0_13], %22 {strides = array<i32>} : memref<128x128xf32, #tpu.memory_space<vmem>>, vector<128x128xf32>,
    %c1_i32 = arith.constant 1 : i32
    %24 = arith.cmpi eq, %arg2, %c1_i32 : i32
    %25 = arith.extui %24 : i1 to i32
    %c0_i32_14 = arith.constant 0 : i32
    %26 = arith.cmpi ne, %25, %c0_i32_14 : i32
    scf.if %26 {
      %c0_15 = arith.constant 0 : index
      %c0_16 = arith.constant 0 : index
      %27 = vector.load %arg9[%c0_15, %c0_16] : memref<128x128xf32, #tpu.memory_space<vmem>>, vector<128x128xf32>
      %c0_17 = arith.constant 0 : index
      %c0_18 = arith.constant 0 : index
      %c0_19 = arith.constant 0 : index
      %28 = vector.load %arg6[%c0_17, %c0_18, %c0_19] : memref<1x1x128xf32, #tpu.memory_space<vmem>>, vector<1x1x128xf32>
      %29 = vector.shape_cast %28 : vector<1x1x128xf32> to vector<1x128xf32>
      %30 = vector.broadcast %29 : vector<1x128xf32> to vector<128x128xf32>
      %31 = arith.addf %27, %30 : vector<128x128xf32>
      %c2_i32 = arith.constant 2 : i32
      %32 = arith.cmpi eq, %arg0, %c2_i32 : i32
      %cst_20 = arith.constant 0.000000e+00 : f32
      %33 = vector.broadcast %cst_20 : f32 to vector<128x128xf32>
      %34 = arith.maximumf %31, %33 : vector<128x128xf32>
      %35 = arith.select %32, %31, %34 : vector<128x128xf32>
      %c128_i32_21 = arith.constant 128 : i32
      %36 = arith.muli %arg1, %c128_i32_21 : i32
      %37 = tpu.assume_multiple %36, 128 : i32
      %38 = arith.index_cast %37 : i32 to index
      %c0_22 = arith.constant 0 : index
      %39 = vector.load %arg7[%38, %c0_22] : memref<256x128xf32, #tpu.memory_space<vmem>>, vector<128x128xf32>
      tpu.vector_store %arg7[%38, %c0_22], %35 {strides = array<i32>} : memref<256x128xf32, #tpu.memory_space<vmem>>, vector<128x128xf32>,
    } else {
    }
    return
  }
  func.func @transform_0(%arg0: i32, %arg1: i32, %arg2: i32) -> (i32, i32) {
    %c0_i32 = arith.constant 0 : i32
    return %arg1, %arg2 : i32, i32
  }
  func.func @transform_1(%arg0: i32, %arg1: i32, %arg2: i32) -> (i32, i32) {
    %c0_i32 = arith.constant 0 : i32
    %c0_i32_0 = arith.constant 0 : i32
    %c0_i32_1 = arith.constant 0 : i32
    return %c0_i32, %c0_i32_0 : i32, i32
  }
  func.func @transform_2(%arg0: i32, %arg1: i32, %arg2: i32) -> (i32, i32, i32) {
    %c0_i32 = arith.constant 0 : i32
    %c0_i32_0 = arith.constant 0 : i32
    %c0_i32_1 = arith.constant 0 : i32
    return %arg0, %c0_i32, %c0_i32_0 : i32, i32, i32
  }
  func.func @transform_3(%arg0: i32, %arg1: i32, %arg2: i32) -> (i32, i32, i32) {
    %c0_i32 = arith.constant 0 : i32
    %c0_i32_0 = arith.constant 0 : i32
    %c0_i32_1 = arith.constant 0 : i32
    return %arg0, %c0_i32, %c0_i32_0 : i32, i32, i32
  }
  func.func @transform_4(%arg0: i32, %arg1: i32, %arg2: i32) -> (i32, i32) {
    %c0_i32 = arith.constant 0 : i32
    %c0_i32_0 = arith.constant 0 : i32
    %c0_i32_1 = arith.constant 0 : i32
    return %c0_i32, %c0_i32_0 : i32, i32
  }
}

</mosaic_0001>

<llo_original>
// kernel: gcn_forward.1
$region0: #{gcn_forward.1}
  #allocation0 [shape = 'u32[]', space=smem, size = 0x4, offset = 0x4, fixed_abs, tag = 'smem constant byte address 0x4 - core index']
  #allocation1 [shape = 'u32[72,128]{1,0:T(1,128)}', space=vmem, size = 0x9000, scoped, tag = 'internal scratch']
  #allocation2 [shape = 'bf16[256,128]{1,0:T(8,128)(2,1)}', space=vmem, size = 0x10000, scoped, tag = 'scratch operand']
  #allocation3 [shape = 'f32[128,128]{1,0:T(8,128)}', space=vmem, size = 0x10000, scoped, tag = 'scratch operand']
  %s0 = inlined_call_operand.vmem [shape: bf16[256,256], index: 0, kind: input, shape index: {}]
  %s1 = inlined_call_operand.vmem [shape: f32[256,128], index: 1, kind: input, shape index: {}]
  %s2 = inlined_call_operand.vmem [shape: f32[3,128,128], index: 2, kind: input, shape index: {}]
  %s3 = inlined_call_operand.vmem [shape: f32[3,1,128], index: 3, kind: input, shape index: {}]
  %s4 = inlined_call_operand.vmem [shape: f32[256,128], index: 4, kind: output, shape index: {}]
  %s5 = sld [smem:[#allocation0]]
  $region106: #{gcn_forward.1} parent=0
    _
  %s7 = ssub.s32 1, %s5
  %s8 = scalar_select 0, %s7, %s5
  $region1: #{gcn_forward.1} parent=0
    #allocation4 [shape = 'u8[65536]{0}', space=vmem, size = 0x10000, scoped, tag = 'input window, operand 0']
    loop: start=0, step=1, limit=14
    $region2: #{gcn_forward.1} parent=1 // loop_pre_header
      _
    $region3: #{gcn_forward.1} parent=1 // loop_header
      %s10 = sphi 0, %s14
      %p11 = scmp.ge.s32.totalorder %s10, 14
      %s17 = sphi 0, %s36
      %s18 = sphi 0, %s32
      %s19 = sphi 0, %s28
      %s20 = sphi 0, %s17
      %s21 = sphi 0, %s18
      %s22 = sphi 0, %s19
      %s23 = sphi 0, %s20
      %s24 = sphi 0, %s21
      %s25 = sphi 0, %s22
      %s41 = sphi 0, %s43
      %s44 = sphi 0, %s41
      %s45 = sphi 0, %s44
      %s61 = sphi 0, %s45
      %s65 = sphi 0, %s65
      %s67 = sphi 0, %s65
      %s68 = sphi 0, %s67
      %s82 = sphi 0, %s68
      %s88 = sphi 0, %s90
      %s91 = sphi 0, %s88
      %s92 = sphi 0, %s91
      %s108 = sphi 0, %s92
      %s114 = sphi 0, %s116
      %s117 = sphi 0, %s114
      %s118 = sphi 0, %s117
      %s134 = sphi 0, %s118
      %s138 = sphi 0, %s138
      %s140 = sphi 0, %s138
      %s141 = sphi 0, %s140
      %s155 = sphi 0, %s141
    $region4: #{gcn_forward.1} parent=1 // loop_header_branch
      %13 = sbr.rel (%p11) target = $region8
    $region5: #{gcn_forward.1} parent=1 // loop_body
      %s15 = ssub.s32 %s10, 1
      %s16 = ssub.s32 %s10, 2
      %s26 = sadd.s32 1, %s19
      %p27 = scmp.ge.s32.totalorder %s26, 2
      %s28 = scalar_select %p27, 0, %s26
      %s29 = sadd.s32 1, %s18
      %s30 = scalar_select %p27, %s29, %s18
      %p31 = scmp.ge.s32.totalorder %s30, 2
      %s32 = scalar_select %p31, 0, %s30
      %s33 = sadd.s32 1, %s17
      %s34 = scalar_select %p31, %s33, %s17
      %p35 = scmp.ge.s32.totalorder %s34, 3
      %s36 = scalar_select %p35, 0, %s34
      %s37 = ssub.s32 %s18, %s32
      %s38 = ssub.s32 %s19, %s28
      %s39 = sor.u32 %s37, %s38
      %p40 = scmp.eq.s32.totalorder %s39, 0
      %s42 = sadd.s32 %s41, 1
      %s43 = scalar_select %p40, %s41, %s42
      %p46 = pneg %p40
      %p47 = scmp.eq.s32.totalorder %s10, 11
      %p48 = por %p46, %p47
      %p49 = scmp.ne.s32.totalorder %s41, %s44
      %p50 = scmp.eq.s32.totalorder %s10, 0
      %p51 = por %p49, %p50
      %p52 = scmp.ne.s32.totalorder %s41, %s44
      %p53 = scmp.eq.s32.totalorder %s15, 11
      %p54 = por %p52, %p53
      %p55 = scmp.ne.s32.totalorder %s44, %s45
      %p56 = scmp.eq.s32.totalorder %s15, 0
      %p57 = por %p55, %p56
      %p58 = scmp.ne.s32.totalorder %s44, %s45
      %p59 = scmp.eq.s32.totalorder %s16, 11
      %p60 = por %p58, %p59
      %p62 = scmp.ne.s32.totalorder %s45, %s61
      %p63 = scmp.eq.s32.totalorder %s16, 0
      %p64 = por %p62, %p63
      %s66 = sadd.s32 %s65, 1
      %p69 = scmp.eq.s32.totalorder %s10, 11
      %p70 = scmp.ne.s32.totalorder %s65, %s67
      %p71 = scmp.eq.s32.totalorder %s10, 0
      %p72 = por %p70, %p71
      %p73 = scmp.ne.s32.totalorder %s65, %s67
      %p74 = scmp.eq.s32.totalorder %s15, 11
      %p75 = por %p73, %p74
      %p76 = scmp.ne.s32.totalorder %s67, %s68
      %p77 = scmp.eq.s32.totalorder %s15, 0
      %p78 = por %p76, %p77
      %p79 = scmp.ne.s32.totalorder %s67, %s68
      %p80 = scmp.eq.s32.totalorder %s16, 11
      %p81 = por %p79, %p80
      %p83 = scmp.ne.s32.totalorder %s68, %s82
      %p84 = scmp.eq.s32.totalorder %s16, 0
      %p85 = por %p83, %p84
      %s86 = ssub.s32 %s17, %s36
      %p87 = scmp.eq.s32.totalorder %s86, 0
      %s89 = sadd.s32 %s88, 1
      %s90 = scalar_select %p87, %s88, %s89
      %p93 = pneg %p87
      %p94 = scmp.eq.s32.totalorder %s10, 11
      %p95 = por %p93, %p94
      %p96 = scmp.ne.s32.totalorder %s88, %s91
      %p97 = scmp.eq.s32.totalorder %s10, 0
      %p98 = por %p96, %p97
      %p99 = scmp.ne.s32.totalorder %s88, %s91
      %p100 = scmp.eq.s32.totalorder %s15, 11
      %p101 = por %p99, %p100
      %p102 = scmp.ne.s32.totalorder %s91, %s92
      %p103 = scmp.eq.s32.totalorder %s15, 0
      %p104 = por %p102, %p103
      %p105 = scmp.ne.s32.totalorder %s91, %s92
      %p106 = scmp.eq.s32.totalorder %s16, 11
      %p107 = por %p105, %p106
      %p109 = scmp.ne.s32.totalorder %s92, %s108
      %p110 = scmp.eq.s32.totalorder %s16, 0
      %p111 = por %p109, %p110
      %s112 = ssub.s32 %s17, %s36
      %p113 = scmp.eq.s32.totalorder %s112, 0
      %s115 = sadd.s32 %s114, 1
      %s116 = scalar_select %p113, %s114, %s115
      %p119 = pneg %p113
      %p120 = scmp.eq.s32.totalorder %s10, 11
      %p121 = por %p119, %p120
      %p122 = scmp.ne.s32.totalorder %s114, %s117
      %p123 = scmp.eq.s32.totalorder %s10, 0
      %p124 = por %p122, %p123
      %p125 = scmp.ne.s32.totalorder %s114, %s117
      %p126 = scmp.eq.s32.totalorder %s15, 11
      %p127 = por %p125, %p126
      %p128 = scmp.ne.s32.totalorder %s117, %s118
      %p129 = scmp.eq.s32.totalorder %s15, 0
      %p130 = por %p128, %p129
      %p131 = scmp.ne.s32.totalorder %s117, %s118
      %p132 = scmp.eq.s32.totalorder %s16, 11
      %p133 = por %p131, %p132
      %p135 = scmp.ne.s32.totalorder %s118, %s134
      %p136 = scmp.eq.s32.totalorder %s16, 0
      %p137 = por %p135, %p136
      %s139 = sadd.s32 %s138, 1
      %p142 = scmp.eq.s32.totalorder %s10, 11
      %p143 = scmp.ne.s32.totalorder %s138, %s140
      %p144 = scmp.eq.s32.totalorder %s10, 0
      %p145 = por %p143, %p144
      %p146 = scmp.ne.s32.totalorder %s138, %s140
      %p147 = scmp.eq.s32.totalorder %s15, 11
      %p148 = por %p146, %p147
      %p149 = scmp.ne.s32.totalorder %s140, %s141
      %p150 = scmp.eq.s32.totalorder %s15, 0
      %p151 = por %p149, %p150
      %p152 = scmp.ne.s32.totalorder %s140, %s141
      %p153 = scmp.eq.s32.totalorder %s16, 11
      %p154 = por %p152, %p153
      %p156 = scmp.ne.s32.totalorder %s141, %s155
      %p157 = scmp.eq.s32.totalorder %s16, 0
      %p158 = por %p156, %p157
      %p159 = scmp.le.s32.totalorder 1, %s10
      %p160 = scmp.lt.s32.totalorder %s10, 13
      %p161 = pnand %p159, %p160
      %p162 = pneg %p161
      // Predicated region
      $region9: #{gcn_forward.1} parent=5 // pred_check
        _
      $region10: #{gcn_forward.1} parent=5 // pred_check_branch
        %164 = sbr.rel (%p161) target = $region12
      $region11: #{gcn_forward.1} parent=5 // pred_region
        %s165 = ssub.s32 %s10, 1
        // Predicated region
        $region13: #{gcn_forward.1} parent=11 // pred_check
          %p166 = pneg %p78
        $region14: #{gcn_forward.1} parent=11 // pred_check_branch
          %168 = sbr.rel (%p166) target = $region16
        $region15: #{gcn_forward.1} parent=11 // pred_region
          _
        $region16: #{gcn_forward.1} parent=11 // pred_fallthru
          _
      $region12: #{gcn_forward.1} parent=5 // pred_fallthru
        _
      %p169 = scmp.lt.s32.totalorder %s10, 12
      // Predicated region
      $region17: #{gcn_forward.1} parent=5 // pred_check
        %p170 = pneg %p169
      $region18: #{gcn_forward.1} parent=5 // pred_check_branch
        %172 = sbr.rel (%p170) target = $region20
      $region19: #{gcn_forward.1} parent=5 // pred_region
        // Predicated region
        $region21: #{gcn_forward.1} parent=19 // pred_check
          %p173 = pneg %p51
        $region22: #{gcn_forward.1} parent=19 // pred_check_branch
          %175 = sbr.rel (%p173) target = $region24
        $region23: #{gcn_forward.1} parent=19 // pred_region
          %s176 = sand.u32 %s41, 1
          %s177 = sand.u32 %s41, 1
          %s178 = smul.addr %s177, 64
          %s179 = scalar_lea.vmem [#allocation4], %s178
          %s180 = smul.u32 16, %s18
          %s181 = smul.addr %s180, 2
          %s182 = sadd.s32 %s19, %s181
          %s183 = smul.addr %s182, 4
          %s184 = scalar_lea.vmem %s0, %s183
          // Predicated region
          $region25: #{gcn_forward.1} parent=23 // pred_check
            _
          $region26: #{gcn_forward.1} parent=23 // pred_check_branch
            %186 = sbr.rel (0) target = $region28
          $region27: #{gcn_forward.1} parent=23 // pred_region
            // Predicated region
            $region29: #{gcn_forward.1} parent=27 // pred_check
              _
            $region30: #{gcn_forward.1} parent=27 // pred_check_branch
              %188 = sbr.rel target = $region32
            $region31: #{gcn_forward.1} parent=27 // pred_region
              // Predicated region
              $region44: #{gcn_forward.1} parent=31 // pred_check
                _
              $region45: #{gcn_forward.1} parent=31 // pred_check_branch
                %234 = sbr.rel (0) target = $region47
              $region46: #{gcn_forward.1} parent=31 // pred_region
                loop: start=0, step=1, limit=1
                $region48: #{gcn_forward.1} parent=46 // loop_pre_header
                  _
                $region49: #{gcn_forward.1} parent=46 // loop_header
                  %s236 = sphi 0, %s240
                  %p237 = scmp.ge.s32.totalorder %s236, 1
                  %s241 = sphi %s184, %s184
                  %s242 = sphi %s179, %s179
                $region50: #{gcn_forward.1} parent=46 // loop_header_branch
                  %239 = sbr.rel (%p237) target = $region54
                $region51: #{gcn_forward.1} parent=46 // loop_body
                  _
                $region52: #{gcn_forward.1} parent=46 // loop_footer
                  %s240 = sadd.s32 1, %s236
                $region53: #{gcn_forward.1} parent=46 // loop_footer_branch
                  %235 = sbr.rel target = $region49
                $region54: #{gcn_forward.1} parent=46 // loop_exit
                  _
                %s244 = ssub.s32 16, 1
                loop: start=0, step=1, limit=1
                $region55: #{gcn_forward.1} parent=46 // loop_pre_header
                  _
                $region56: #{gcn_forward.1} parent=46 // loop_header
                  %s246 = sphi 0, %s250
                  %p247 = scmp.ge.s32.totalorder %s246, 1
                  %s251 = sphi %s184, %s184
                  %s252 = sphi %s179, %s179
                $region57: #{gcn_forward.1} parent=46 // loop_header_branch
                  %249 = sbr.rel (%p247) target = $region61
                $region58: #{gcn_forward.1} parent=46 // loop_body
                  %v253 = vld [vmem:[%s251] sm:%s244]
                  %254 = vst [vmem:[%s252] sm:%s244] %v253
                  %v255 = vld [vmem:[%s251 + $0x8] sm:%s244]
                  %256 = vst [vmem:[%s252 + $0x4] sm:%s244] %v255
                  %v257 = vld [vmem:[%s251 + $0x10] sm:%s244]
                  %258 = vst [vmem:[%s252 + $0x8] sm:%s244] %v257
                  %v259 = vld [vmem:[%s251 + $0x18] sm:%s244]
                  %260 = vst [vmem:[%s252 + $0xc] sm:%s244] %v259
                  %v261 = vld [vmem:[%s251 + $0x20] sm:%s244]
                  %262 = vst [vmem:[%s252 + $0x10] sm:%s244] %v261
                  %v263 = vld [vmem:[%s251 + $0x28] sm:%s244]
                  %264 = vst [vmem:[%s252 + $0x14] sm:%s244] %v263
                  %v265 = vld [vmem:[%s251 + $0x30] sm:%s244]
                  %266 = vst [vmem:[%s252 + $0x18] sm:%s244] %v265
                  %v267 = vld [vmem:[%s251 + $0x38] sm:%s244]
                  %268 = vst [vmem:[%s252 + $0x1c] sm:%s244] %v267
                  %v269 = vld [vmem:[%s251 + $0x40] sm:%s244]
                  %270 = vst [vmem:[%s252 + $0x20] sm:%s244] %v269
                  %v271 = vld [vmem:[%s251 + $0x48] sm:%s244]
                  %272 = vst [vmem:[%s252 + $0x24] sm:%s244] %v271
                  %v273 = vld [vmem:[%s251 + $0x50] sm:%s244]
                  %274 = vst [vmem:[%s252 + $0x28] sm:%s244] %v273
                  %v275 = vld [vmem:[%s251 + $0x58] sm:%s244]
                  %276 = vst [vmem:[%s252 + $0x2c] sm:%s244] %v275
                  %v277 = vld [vmem:[%s251 + $0x60] sm:%s244]
                  %278 = vst [vmem:[%s252 + $0x30] sm:%s244] %v277
                  %v279 = vld [vmem:[%s251 + $0x68] sm:%s244]
                  %280 = vst [vmem:[%s252 + $0x34] sm:%s244] %v279
                  %v281 = vld [vmem:[%s251 + $0x70] sm:%s244]
                  %282 = vst [vmem:[%s252 + $0x38] sm:%s244] %v281
                  %v283 = vld [vmem:[%s251 + $0x78] sm:%s244]
                  %284 = vst [vmem:[%s252 + $0x3c] sm:%s244] %v283
                $region59: #{gcn_forward.1} parent=46 // loop_footer
                  %s250 = sadd.s32 1, %s246
                $region60: #{gcn_forward.1} parent=46 // loop_footer_branch
                  %245 = sbr.rel target = $region56
                $region61: #{gcn_forward.1} parent=46 // loop_exit
                  _
              $region47: #{gcn_forward.1} parent=31 // pred_fallthru
                _
            $region32: #{gcn_forward.1} parent=27 // pred_fallthru
              _
            // Predicated region
            $region33: #{gcn_forward.1} parent=27 // pred_check
              _
            $region34: #{gcn_forward.1} parent=27 // pred_check_branch
              %190 = sbr.rel (0) target = $region36
            $region35: #{gcn_forward.1} parent=27 // pred_region
              %s192 = ssub.s32 16, 1
              loop: start=0, step=1, limit=1
              $region37: #{gcn_forward.1} parent=35 // loop_pre_header
                _
              $region38: #{gcn_forward.1} parent=35 // loop_header
                %s194 = sphi 0, %s198
                %p195 = scmp.ge.s32.totalorder %s194, 1
                %s199 = sphi %s184, %s184
                %s200 = sphi %s179, %s179
              $region39: #{gcn_forward.1} parent=35 // loop_header_branch
                %197 = sbr.rel (%p195) target = $region43
              $region40: #{gcn_forward.1} parent=35 // loop_body
                %v201 = vld [vmem:[%s199] sm:%s192]
                %202 = vst [vmem:[%s200] sm:%s192] %v201
                %v203 = vld [vmem:[%s199 + $0x8] sm:%s192]
                %204 = vst [vmem:[%s200 + $0x4] sm:%s192] %v203
                %v205 = vld [vmem:[%s199 + $0x10] sm:%s192]
                %206 = vst [vmem:[%s200 + $0x8] sm:%s192] %v205
                %v207 = vld [vmem:[%s199 + $0x18] sm:%s192]
                %208 = vst [vmem:[%s200 + $0xc] sm:%s192] %v207
                %v209 = vld [vmem:[%s199 + $0x20] sm:%s192]
                %210 = vst [vmem:[%s200 + $0x10] sm:%s192] %v209
                %v211 = vld [vmem:[%s199 + $0x28] sm:%s192]
                %212 = vst [vmem:[%s200 + $0x14] sm:%s192] %v211
                %v213 = vld [vmem:[%s199 + $0x30] sm:%s192]
                %214 = vst [vmem:[%s200 + $0x18] sm:%s192] %v213
                %v215 = vld [vmem:[%s199 + $0x38] sm:%s192]
                %216 = vst [vmem:[%s200 + $0x1c] sm:%s192] %v215
                %v217 = vld [vmem:[%s199 + $0x40] sm:%s192]
                %218 = vst [vmem:[%s200 + $0x20] sm:%s192] %v217
                %v219 = vld [vmem:[%s199 + $0x48] sm:%s192]
                %220 = vst [vmem:[%s200 + $0x24] sm:%s192] %v219
                %v221 = vld [vmem:[%s199 + $0x50] sm:%s192]
                %222 = vst [vmem:[%s200 + $0x28] sm:%s192] %v221
                %v223 = vld [vmem:[%s199 + $0x58] sm:%s192]
                %224 = vst [vmem:[%s200 + $0x2c] sm:%s192] %v223
                %v225 = vld [vmem:[%s199 + $0x60] sm:%s192]
                %226 = vst [vmem:[%s200 + $0x30] sm:%s192] %v225
                %v227 = vld [vmem:[%s199 + $0x68] sm:%s192]
                %228 = vst [vmem:[%s200 + $0x34] sm:%s192] %v227
                %v229 = vld [vmem:[%s199 + $0x70] sm:%s192]
                %230 = vst [vmem:[%s200 + $0x38] sm:%s192] %v229
                %v231 = vld [vmem:[%s199 + $0x78] sm:%s192]
                %232 = vst [vmem:[%s200 + $0x3c] sm:%s192] %v231
              $region41: #{gcn_forward.1} parent=35 // loop_footer
                %s198 = sadd.s32 1, %s194
              $region42: #{gcn_forward.1} parent=35 // loop_footer_branch
                %193 = sbr.rel target = $region38
              $region43: #{gcn_forward.1} parent=35 // loop_exit
                _
            $region36: #{gcn_forward.1} parent=27 // pred_fallthru
              _
          $region28: #{gcn_forward.1} parent=23 // pred_fallthru
            _
          %285 = vnop
        $region24: #{gcn_forward.1} parent=19 // pred_fallthru
          _
        // Predicated region
        $region62: #{gcn_forward.1} parent=19 // pred_check
          %p286 = pneg %p98
        $region63: #{gcn_forward.1} parent=19 // pred_check_branch
          %288 = sbr.rel (%p286) target = $region65
        $region64: #{gcn_forward.1} parent=19 // pred_region
          %p289 = scmp.lt.s32.totalorder %s17, 2
          %s290 = scalar_select %p289, %s17, 2
          %s291 = smul.addr %s290, 16
          %s292 = smul.addr %s291, 8
          %s293 = scalar_lea.vmem %s2, %s292
        $region65: #{gcn_forward.1} parent=19 // pred_fallthru
          _
        // Predicated region
        $region66: #{gcn_forward.1} parent=19 // pred_check
          %p294 = pneg %p124
        $region67: #{gcn_forward.1} parent=19 // pred_check_branch
          %296 = sbr.rel (%p294) target = $region69
        $region68: #{gcn_forward.1} parent=19 // pred_region
          %p297 = scmp.lt.s32.totalorder %s17, 2
          %s298 = scalar_select %p297, %s17, 2
          %s299 = scalar_lea.vmem %s3, %s298
        $region69: #{gcn_forward.1} parent=19 // pred_fallthru
          _
      $region20: #{gcn_forward.1} parent=5 // pred_fallthru
        _
      %p300 = scmp.le.s32.totalorder 1, %s10
      %p301 = scmp.lt.s32.totalorder %s10, 13
      %p302 = pnand %p300, %p301
      %p303 = pneg %p302
      // Predicated region
      $region70: #{gcn_forward.1} parent=5 // pred_check
        _
      $region71: #{gcn_forward.1} parent=5 // pred_check_branch
        %305 = sbr.rel (%p302) target = $region73
      $region72: #{gcn_forward.1} parent=5 // pred_region
        %s306 = ssub.s32 %s10, 1
        %s307 = sand.u32 %s44, 1
        %s308 = sand.u32 %s44, 1
        %s309 = smul.addr %s308, 64
        %s310 = scalar_lea.vmem [#allocation4], %s309
        // Predicated region
        $region74: #{gcn_forward.1} parent=72 // pred_check
          %p311 = pneg %p57
        $region75: #{gcn_forward.1} parent=72 // pred_check_branch
          %313 = sbr.rel (%p311) target = $region77
        $region76: #{gcn_forward.1} parent=72 // pred_region
          _
        $region77: #{gcn_forward.1} parent=72 // pred_fallthru
          _
        %s314 = sand.u32 %s44, 1
        %s315 = sand.u32 %s44, 1
        %s316 = smul.addr %s315, 64
        %s317 = scalar_lea.vmem [#allocation4], %s316
        %p318 = pneg %p57
        %p319 = pneg %p54
        %p320 = pneg %p78
        %p321 = pneg %p75
        %p322 = scmp.lt.s32.totalorder %s20, 2
        %s323 = scalar_select %p322, %s20, 2
        %s324 = smul.addr %s323, 16
        %s325 = smul.addr %s324, 8
        %s326 = scalar_lea.vmem %s2, %s325
        %p327 = pneg %p104
        %p328 = pneg %p101
        %p329 = scmp.lt.s32.totalorder %s20, 2
        %s330 = scalar_select %p329, %s20, 2
        %s331 = scalar_lea.vmem %s3, %s330
        %p332 = pneg %p130
        %p333 = pneg %p127
        %p334 = pneg %p151
        %p335 = pneg %p148
        %s336 = smul.u32 16, %s21
        %p337 = scmp.lt.s32.totalorder %s20, 2
        %s338 = scalar_select %p337, %s20, 2
        %s339 = smul.addr %s338, 16
        %s340 = smul.addr %s339, 8
        %s341 = scalar_lea.vmem %s2, %s340
        %p342 = scmp.lt.s32.totalorder %s20, 2
        %s343 = scalar_select %p342, %s20, 2
        %s344 = scalar_lea.vmem %s3, %s343
        %p345 = scmp.eq.s32.totalorder %s20, 0
        %p346 = scmp.eq.s32.totalorder %s21, 0
        %p347 = pnand %p345, %p346
        %p348 = pneg %p347
        %p349 = scmp.eq.s32.totalorder %s22, 0
        %p350 = pnand %p348, %p349
        %p351 = pneg %p350
        // Predicated region
        $region78: #{gcn_forward.1} parent=72 // pred_check
          _
        $region79: #{gcn_forward.1} parent=72 // pred_check_branch
          %353 = sbr.rel (%p350) target = $region81
        $region80: #{gcn_forward.1} parent=72 // pred_region
          %v354 = vld [vmem:[%s1] sm:$0xff]
          %v355 = vld [vmem:[%s1 + $0x8] sm:$0xff]
          %v356 = vld [vmem:[%s1 + $0x10] sm:$0xff]
          %v357 = vld [vmem:[%s1 + $0x18] sm:$0xff]
          %v358 = vld [vmem:[%s1 + $0x20] sm:$0xff]
          %v359 = vld [vmem:[%s1 + $0x28] sm:$0xff]
          %v360 = vld [vmem:[%s1 + $0x30] sm:$0xff]
          %v361 = vld [vmem:[%s1 + $0x38] sm:$0xff]
          %v362 = vld [vmem:[%s1 + $0x40] sm:$0xff]
          %v363 = vld [vmem:[%s1 + $0x48] sm:$0xff]
          %v364 = vld [vmem:[%s1 + $0x50] sm:$0xff]
          %v365 = vld [vmem:[%s1 + $0x58] sm:$0xff]
          %v366 = vld [vmem:[%s1 + $0x60] sm:$0xff]
          %v367 = vld [vmem:[%s1 + $0x68] sm:$0xff]
          %v368 = vld [vmem:[%s1 + $0x70] sm:$0xff]
          %v369 = vld [vmem:[%s1 + $0x78] sm:$0xff]
          %v370 = vld [vmem:[%s1 + $0x80] sm:$0xff]
          %v371 = vld [vmem:[%s1 + $0x88] sm:$0xff]
          %v372 = vld [vmem:[%s1 + $0x90] sm:$0xff]
          %v373 = vld [vmem:[%s1 + $0x98] sm:$0xff]
          %v374 = vld [vmem:[%s1 + $0xa0] sm:$0xff]
          %v375 = vld [vmem:[%s1 + $0xa8] sm:$0xff]
          %v376 = vld [vmem:[%s1 + $0xb0] sm:$0xff]
          %v377 = vld [vmem:[%s1 + $0xb8] sm:$0xff]
          %v378 = vld [vmem:[%s1 + $0xc0] sm:$0xff]
          %v379 = vld [vmem:[%s1 + $0xc8] sm:$0xff]
          %v380 = vld [vmem:[%s1 + $0xd0] sm:$0xff]
          %v381 = vld [vmem:[%s1 + $0xd8] sm:$0xff]
          %v382 = vld [vmem:[%s1 + $0xe0] sm:$0xff]
          %v383 = vld [vmem:[%s1 + $0xe8] sm:$0xff]
          %v384 = vld [vmem:[%s1 + $0xf0] sm:$0xff]
          %v385 = vld [vmem:[%s1 + $0xf8] sm:$0xff]
          %386 = vst [vmem:[%s4] sm:$0xff] %v354
          %387 = vst [vmem:[%s4 + $0x8] sm:$0xff] %v355
          %388 = vst [vmem:[%s4 + $0x10] sm:$0xff] %v356
          %389 = vst [vmem:[%s4 + $0x18] sm:$0xff] %v357
          %390 = vst [vmem:[%s4 + $0x20] sm:$0xff] %v358
          %391 = vst [vmem:[%s4 + $0x28] sm:$0xff] %v359
          %392 = vst [vmem:[%s4 + $0x30] sm:$0xff] %v360
          %393 = vst [vmem:[%s4 + $0x38] sm:$0xff] %v361
          %394 = vst [vmem:[%s4 + $0x40] sm:$0xff] %v362
          %395 = vst [vmem:[%s4 + $0x48] sm:$0xff] %v363
          %396 = vst [vmem:[%s4 + $0x50] sm:$0xff] %v364
          %397 = vst [vmem:[%s4 + $0x58] sm:$0xff] %v365
          %398 = vst [vmem:[%s4 + $0x60] sm:$0xff] %v366
          %399 = vst [vmem:[%s4 + $0x68] sm:$0xff] %v367
          %400 = vst [vmem:[%s4 + $0x70] sm:$0xff] %v368
          %401 = vst [vmem:[%s4 + $0x78] sm:$0xff] %v369
          %402 = vst [vmem:[%s4 + $0x80] sm:$0xff] %v370
          %403 = vst [vmem:[%s4 + $0x88] sm:$0xff] %v371
          %404 = vst [vmem:[%s4 + $0x90] sm:$0xff] %v372
          %405 = vst [vmem:[%s4 + $0x98] sm:$0xff] %v373
          %406 = vst [vmem:[%s4 + $0xa0] sm:$0xff] %v374
          %407 = vst [vmem:[%s4 + $0xa8] sm:$0xff] %v375
          %408 = vst [vmem:[%s4 + $0xb0] sm:$0xff] %v376
          %409 = vst [vmem:[%s4 + $0xb8] sm:$0xff] %v377
          %410 = vst [vmem:[%s4 + $0xc0] sm:$0xff] %v378
          %411 = vst [vmem:[%s4 + $0xc8] sm:$0xff] %v379
          %412 = vst [vmem:[%s4 + $0xd0] sm:$0xff] %v380
          %413 = vst [vmem:[%s4 + $0xd8] sm:$0xff] %v381
          %414 = vst [vmem:[%s4 + $0xe0] sm:$0xff] %v382
          %415 = vst [vmem:[%s4 + $0xe8] sm:$0xff] %v383
          %416 = vst [vmem:[%s4 + $0xf0] sm:$0xff] %v384
          %417 = vst [vmem:[%s4 + $0xf8] sm:$0xff] %v385
        $region81: #{gcn_forward.1} parent=72 // pred_fallthru
          _
        %p418 = pnand %p346, %p349
        %p419 = pneg %p418
        // Predicated region
        $region82: #{gcn_forward.1} parent=72 // pred_check
          _
        $region83: #{gcn_forward.1} parent=72 // pred_check_branch
          %421 = sbr.rel (%p418) target = $region85
        $region84: #{gcn_forward.1} parent=72 // pred_region
          %v422 = vld [vmem:[%s4] sm:$0xff]
          %v423 = vld [vmem:[%s4 + $0x8] sm:$0xff]
          %v424 = vld [vmem:[%s4 + $0x10] sm:$0xff]
          %v425 = vld [vmem:[%s4 + $0x18] sm:$0xff]
          %v426 = vld [vmem:[%s4 + $0x20] sm:$0xff]
          %v427 = vld [vmem:[%s4 + $0x28] sm:$0xff]
          %v428 = vld [vmem:[%s4 + $0x30] sm:$0xff]
          %v429 = vld [vmem:[%s4 + $0x38] sm:$0xff]
          %v430 = vld [vmem:[%s4 + $0x40] sm:$0xff]
          %v431 = vld [vmem:[%s4 + $0x48] sm:$0xff]
          %v432 = vld [vmem:[%s4 + $0x50] sm:$0xff]
          %v433 = vld [vmem:[%s4 + $0x58] sm:$0xff]
          %v434 = vld [vmem:[%s4 + $0x60] sm:$0xff]
          %v435 = vld [vmem:[%s4 + $0x68] sm:$0xff]
          %v436 = vld [vmem:[%s4 + $0x70] sm:$0xff]
          %v437 = vld [vmem:[%s4 + $0x78] sm:$0xff]
          %v438 = vld [vmem:[%s4 + $0x80] sm:$0xff]
          %v439 = vld [vmem:[%s4 + $0x88] sm:$0xff]
          %v440 = vld [vmem:[%s4 + $0x90] sm:$0xff]
          %v441 = vld [vmem:[%s4 + $0x98] sm:$0xff]
          %v442 = vld [vmem:[%s4 + $0xa0] sm:$0xff]
          %v443 = vld [vmem:[%s4 + $0xa8] sm:$0xff]
          %v444 = vld [vmem:[%s4 + $0xb0] sm:$0xff]
          %v445 = vld [vmem:[%s4 + $0xb8] sm:$0xff]
          %v446 = vld [vmem:[%s4 + $0xc0] sm:$0xff]
          %v447 = vld [vmem:[%s4 + $0xc8] sm:$0xff]
          %v448 = vld [vmem:[%s4 + $0xd0] sm:$0xff]
          %v449 = vld [vmem:[%s4 + $0xd8] sm:$0xff]
          %v450 = vld [vmem:[%s4 + $0xe0] sm:$0xff]
          %v451 = vld [vmem:[%s4 + $0xe8] sm:$0xff]
          %v452 = vld [vmem:[%s4 + $0xf0] sm:$0xff]
          %v453 = vld [vmem:[%s4 + $0xf8] sm:$0xff]
          %v454 = vld [vmem:[%s341] sm:$0xff]
          %v455 = vld [vmem:[%s341 + $0x8] sm:$0xff]
          %v456 = vld [vmem:[%s341 + $0x10] sm:$0xff]
          %v457 = vld [vmem:[%s341 + $0x18] sm:$0xff]
          %v458 = vld [vmem:[%s341 + $0x20] sm:$0xff]
          %v459 = vld [vmem:[%s341 + $0x28] sm:$0xff]
          %v460 = vld [vmem:[%s341 + $0x30] sm:$0xff]
          %v461 = vld [vmem:[%s341 + $0x38] sm:$0xff]
          %v462 = vld [vmem:[%s341 + $0x40] sm:$0xff]
          %v463 = vld [vmem:[%s341 + $0x48] sm:$0xff]
          %v464 = vld [vmem:[%s341 + $0x50] sm:$0xff]
          %v465 = vld [vmem:[%s341 + $0x58] sm:$0xff]
          %v466 = vld [vmem:[%s341 + $0x60] sm:$0xff]
          %v467 = vld [vmem:[%s341 + $0x68] sm:$0xff]
          %v468 = vld [vmem:[%s341 + $0x70] sm:$0xff]
          %v469 = vld [vmem:[%s341 + $0x78] sm:$0xff]
          %470 = vmatpush.msra.mxu0 %v469
          %471 = vmatpush.msra.mxu0 %v468
          %472 = vmatpush.msra.mxu0 %v467
          %473 = vmatpush.msra.mxu0 %v466
          %474 = vmatpush.msra.mxu0 %v465
          %475 = vmatpush.msra.mxu0 %v464
          %476 = vmatpush.msra.mxu0 %v463
          %477 = vmatpush.msra.mxu0 %v462
          %478 = vmatpush.msra.mxu0 %v461
          %479 = vmatpush.msra.mxu0 %v460
          %480 = vmatpush.msra.mxu0 %v459
          %481 = vmatpush.msra.mxu0 %v458
          %482 = vmatpush.msra.mxu0 %v457
          %483 = vmatpush.msra.mxu0 %v456
          %484 = vmatpush.msra.mxu0 %v455
          %485 = vmatpush.msra.mxu0 %v454
          %486 = vmatmul.f32.gmra.mxu0 %v422
          %v487 = vpop.f32.mrf.mxu0
          %v488 = vadd.f32 0.0, %v487
          %489 = vmatmul.f32.gmra.mxu0 %v423
          %v490 = vpop.f32.mrf.mxu0
          %v491 = vadd.f32 0.0, %v490
          %492 = vmatmul.f32.gmra.mxu0 %v424
          %v493 = vpop.f32.mrf.mxu0
          %v494 = vadd.f32 0.0, %v493
          %495 = vmatmul.f32.gmra.mxu0 %v425
          %v496 = vpop.f32.mrf.mxu0
          %v497 = vadd.f32 0.0, %v496
          %498 = vmatmul.f32.gmra.mxu0 %v426
          %v499 = vpop.f32.mrf.mxu0
          %v500 = vadd.f32 0.0, %v499
          %501 = vmatmul.f32.gmra.mxu0 %v427
          %v502 = vpop.f32.mrf.mxu0
          %v503 = vadd.f32 0.0, %v502
          %504 = vmatmul.f32.gmra.mxu0 %v428
          %v505 = vpop.f32.mrf.mxu0
          %v506 = vadd.f32 0.0, %v505
          %507 = vmatmul.f32.gmra.mxu0 %v429
          %v508 = vpop.f32.mrf.mxu0
          %v509 = vadd.f32 0.0, %v508
          %510 = vmatmul.f32.gmra.mxu0 %v430
          %v511 = vpop.f32.mrf.mxu0
          %v512 = vadd.f32 0.0, %v511
          %513 = vmatmul.f32.gmra.mxu0 %v431
          %v514 = vpop.f32.mrf.mxu0
          %v515 = vadd.f32 0.0, %v514
          %516 = vmatmul.f32.gmra.mxu0 %v432
          %v517 = vpop.f32.mrf.mxu0
          %v518 = vadd.f32 0.0, %v517
          %519 = vmatmul.f32.gmra.mxu0 %v433
          %v520 = vpop.f32.mrf.mxu0
          %v521 = vadd.f32 0.0, %v520
          %522 = vmatmul.f32.gmra.mxu0 %v434
          %v523 = vpop.f32.mrf.mxu0
          %v524 = vadd.f32 0.0, %v523
          %525 = vmatmul.f32.gmra.mxu0 %v435
          %v526 = vpop.f32.mrf.mxu0
          %v527 = vadd.f32 0.0, %v526
          %528 = vmatmul.f32.gmra.mxu0 %v436
          %v529 = vpop.f32.mrf.mxu0
          %v530 = vadd.f32 0.0, %v529
          %531 = vmatmul.f32.gmra.mxu0 %v437
          %v532 = vpop.f32.mrf.mxu0
          %v533 = vadd.f32 0.0, %v532
          %534 = vmatmul.f32.gmra.mxu0 %v438
          %v535 = vpop.f32.mrf.mxu0
          %v536 = vadd.f32 0.0, %v535
          %537 = vmatmul.f32.gmra.mxu0 %v439
          %v538 = vpop.f32.mrf.mxu0
          %v539 = vadd.f32 0.0, %v538
          %540 = vmatmul.f32.gmra.mxu0 %v440
          %v541 = vpop.f32.mrf.mxu0
          %v542 = vadd.f32 0.0, %v541
          %543 = vmatmul.f32.gmra.mxu0 %v441
          %v544 = vpop.f32.mrf.mxu0
          %v545 = vadd.f32 0.0, %v544
          %546 = vmatmul.f32.gmra.mxu0 %v442
          %v547 = vpop.f32.mrf.mxu0
          %v548 = vadd.f32 0.0, %v547
          %549 = vmatmul.f32.gmra.mxu0 %v443
          %v550 = vpop.f32.mrf.mxu0
          %v551 = vadd.f32 0.0, %v550
          %552 = vmatmul.f32.gmra.mxu0 %v444
          %v553 = vpop.f32.mrf.mxu0
          %v554 = vadd.f32 0.0, %v553
          %555 = vmatmul.f32.gmra.mxu0 %v445
          %v556 = vpop.f32.mrf.mxu0
          %v557 = vadd.f32 0.0, %v556
          %558 = vmatmul.f32.gmra.mxu0 %v446
          %v559 = vpop.f32.mrf.mxu0
          %v560 = vadd.f32 0.0, %v559
          %561 = vmatmul.f32.gmra.mxu0 %v447
          %v562 = vpop.f32.mrf.mxu0
          %v563 = vadd.f32 0.0, %v562
          %564 = vmatmul.f32.gmra.mxu0 %v448
          %v565 = vpop.f32.mrf.mxu0
          %v566 = vadd.f32 0.0, %v565
          %567 = vmatmul.f32.gmra.mxu0 %v449
          %v568 = vpop.f32.mrf.mxu0
          %v569 = vadd.f32 0.0, %v568
          %570 = vmatmul.f32.gmra.mxu0 %v450
          %v571 = vpop.f32.mrf.mxu0
          %v572 = vadd.f32 0.0, %v571
          %573 = vmatmul.f32.gmra.mxu0 %v451
          %v574 = vpop.f32.mrf.mxu0
          %v575 = vadd.f32 0.0, %v574
          %576 = vmatmul.f32.gmra.mxu0 %v452
          %v577 = vpop.f32.mrf.mxu0
          %v578 = vadd.f32 0.0, %v577
          %579 = vmatmul.f32.gmra.mxu0 %v453
          %v580 = vpop.f32.mrf.mxu0
          %v581 = vadd.f32 0.0, %v580
          %582 = vdwg.mxu0
          %v583 = vpack.c.bf16 %v488, %v488
          %v584 = vpack.c.bf16 %v491, %v491
          %v585 = vpack.c.bf16 %v494, %v494
          %v586 = vpack.c.bf16 %v497, %v497
          %v587 = vpack.c.bf16 %v500, %v500
          %v588 = vpack.c.bf16 %v503, %v503
          %v589 = vpack.c.bf16 %v506, %v506
          %v590 = vpack.c.bf16 %v509, %v509
          %v591 = vpack.c.bf16 %v512, %v512
          %v592 = vpack.c.bf16 %v515, %v515
          %v593 = vpack.c.bf16 %v518, %v518
          %v594 = vpack.c.bf16 %v521, %v521
          %v595 = vpack.c.bf16 %v524, %v524
          %v596 = vpack.c.bf16 %v527, %v527
          %v597 = vpack.c.bf16 %v530, %v530
          %v598 = vpack.c.bf16 %v533, %v533
          %v599 = vpack.c.bf16 %v536, %v536
          %v600 = vpack.c.bf16 %v539, %v539
          %v601 = vpack.c.bf16 %v542, %v542
          %v602 = vpack.c.bf16 %v545, %v545
          %v603 = vpack.c.bf16 %v548, %v548
          %v604 = vpack.c.bf16 %v551, %v551
          %v605 = vpack.c.bf16 %v554, %v554
          %v606 = vpack.c.bf16 %v557, %v557
          %v607 = vpack.c.bf16 %v560, %v560
          %v608 = vpack.c.bf16 %v563, %v563
          %v609 = vpack.c.bf16 %v566, %v566
          %v610 = vpack.c.bf16 %v569, %v569
          %v611 = vpack.c.bf16 %v572, %v572
          %v612 = vpack.c.bf16 %v575, %v575
          %v613 = vpack.c.bf16 %v578, %v578
          %v614 = vpack.c.bf16 %v581, %v581
          %615 = vst [vmem:[#allocation2] sm:$0xf] %v583
          %616 = vst [vmem:[#allocation2 + $0x4] sm:$0xf] %v584
          %617 = vst [vmem:[#allocation2 + $0x8] sm:$0xf] %v585
          %618 = vst [vmem:[#allocation2 + $0xc] sm:$0xf] %v586
          %619 = vst [vmem:[#allocation2 + $0x10] sm:$0xf] %v587
          %620 = vst [vmem:[#allocation2 + $0x14] sm:$0xf] %v588
          %621 = vst [vmem:[#allocation2 + $0x18] sm:$0xf] %v589
          %622 = vst [vmem:[#allocation2 + $0x1c] sm:$0xf] %v590
          %623 = vst [vmem:[#allocation2 + $0x20] sm:$0xf] %v591
          %624 = vst [vmem:[#allocation2 + $0x24] sm:$0xf] %v592
          %625 = vst [vmem:[#allocation2 + $0x28] sm:$0xf] %v593
          %626 = vst [vmem:[#allocation2 + $0x2c] sm:$0xf] %v594
          %627 = vst [vmem:[#allocation2 + $0x30] sm:$0xf] %v595
          %628 = vst [vmem:[#allocation2 + $0x34] sm:$0xf] %v596
          %629 = vst [vmem:[#allocation2 + $0x38] sm:$0xf] %v597
          %630 = vst [vmem:[#allocation2 + $0x3c] sm:$0xf] %v598
          %631 = vst [vmem:[#allocation2 + $0x40] sm:$0xf] %v599
          %632 = vst [vmem:[#allocation2 + $0x44] sm:$0xf] %v600
          %633 = vst [vmem:[#allocation2 + $0x48] sm:$0xf] %v601
          %634 = vst [vmem:[#allocation2 + $0x4c] sm:$0xf] %v602
          %635 = vst [vmem:[#allocation2 + $0x50] sm:$0xf] %v603
          %636 = vst [vmem:[#allocation2 + $0x54] sm:$0xf] %v604
          %637 = vst [vmem:[#allocation2 + $0x58] sm:$0xf] %v605
          %638 = vst [vmem:[#allocation2 + $0x5c] sm:$0xf] %v606
          %639 = vst [vmem:[#allocation2 + $0x60] sm:$0xf] %v607
          %640 = vst [vmem:[#allocation2 + $0x64] sm:$0xf] %v608
          %641 = vst [vmem:[#allocation2 + $0x68] sm:$0xf] %v609
          %642 = vst [vmem:[#allocation2 + $0x6c] sm:$0xf] %v610
          %643 = vst [vmem:[#allocation2 + $0x70] sm:$0xf] %v611
          %644 = vst [vmem:[#allocation2 + $0x74] sm:$0xf] %v612
          %645 = vst [vmem:[#allocation2 + $0x78] sm:$0xf] %v613
          %646 = vst [vmem:[#allocation2 + $0x7c] sm:$0xf] %v614
        $region85: #{gcn_forward.1} parent=72 // pred_fallthru
          _
        // Predicated region
        $region86: #{gcn_forward.1} parent=72 // pred_check
          %p647 = pneg %p349
        $region87: #{gcn_forward.1} parent=72 // pred_check_branch
          %649 = sbr.rel (%p647) target = $region89
        $region88: #{gcn_forward.1} parent=72 // pred_region
          %650 = vst [vmem:[#allocation3] sm:$0xff] 0.0
          %651 = vst [vmem:[#allocation3 + $0x8] sm:$0xff] 0.0
          %652 = vst [vmem:[#allocation3 + $0x10] sm:$0xff] 0.0
          %653 = vst [vmem:[#allocation3 + $0x18] sm:$0xff] 0.0
          %654 = vst [vmem:[#allocation3 + $0x20] sm:$0xff] 0.0
          %655 = vst [vmem:[#allocation3 + $0x28] sm:$0xff] 0.0
          %656 = vst [vmem:[#allocation3 + $0x30] sm:$0xff] 0.0
          %657 = vst [vmem:[#allocation3 + $0x38] sm:$0xff] 0.0
          %658 = vst [vmem:[#allocation3 + $0x40] sm:$0xff] 0.0
          %659 = vst [vmem:[#allocation3 + $0x48] sm:$0xff] 0.0
          %660 = vst [vmem:[#allocation3 + $0x50] sm:$0xff] 0.0
          %661 = vst [vmem:[#allocation3 + $0x58] sm:$0xff] 0.0
          %662 = vst [vmem:[#allocation3 + $0x60] sm:$0xff] 0.0
          %663 = vst [vmem:[#allocation3 + $0x68] sm:$0xff] 0.0
          %664 = vst [vmem:[#allocation3 + $0x70] sm:$0xff] 0.0
          %665 = vst [vmem:[#allocation3 + $0x78] sm:$0xff] 0.0
        $region89: #{gcn_forward.1} parent=72 // pred_fallthru
          _
        %s666 = smul.u32 %s22, 128
        %v667 = vld [vmem:[#allocation3] sm:$0xff]
        %v668 = vld [vmem:[#allocation3 + $0x8] sm:$0xff]
        %v669 = vld [vmem:[#allocation3 + $0x10] sm:$0xff]
        %v670 = vld [vmem:[#allocation3 + $0x18] sm:$0xff]
        %v671 = vld [vmem:[#allocation3 + $0x20] sm:$0xff]
        %v672 = vld [vmem:[#allocation3 + $0x28] sm:$0xff]
        %v673 = vld [vmem:[#allocation3 + $0x30] sm:$0xff]
        %v674 = vld [vmem:[#allocation3 + $0x38] sm:$0xff]
        %v675 = vld [vmem:[#allocation3 + $0x40] sm:$0xff]
        %v676 = vld [vmem:[#allocation3 + $0x48] sm:$0xff]
        %v677 = vld [vmem:[#allocation3 + $0x50] sm:$0xff]
        %v678 = vld [vmem:[#allocation3 + $0x58] sm:$0xff]
        %v679 = vld [vmem:[#allocation3 + $0x60] sm:$0xff]
        %v680 = vld [vmem:[#allocation3 + $0x68] sm:$0xff]
        %v681 = vld [vmem:[#allocation3 + $0x70] sm:$0xff]
        %v682 = vld [vmem:[#allocation3 + $0x78] sm:$0xff]
        %v683 = vld [vmem:[%s310] sm:$0xf]
        %v684 = vld [vmem:[%s310 + $0x4] sm:$0xf]
        %v685 = vld [vmem:[%s310 + $0x8] sm:$0xf]
        %v686 = vld [vmem:[%s310 + $0xc] sm:$0xf]
        %v687 = vld [vmem:[%s310 + $0x10] sm:$0xf]
        %v688 = vld [vmem:[%s310 + $0x14] sm:$0xf]
        %v689 = vld [vmem:[%s310 + $0x18] sm:$0xf]
        %v690 = vld [vmem:[%s310 + $0x1c] sm:$0xf]
        %v691 = vld [vmem:[%s310 + $0x20] sm:$0xf]
        %v692 = vld [vmem:[%s310 + $0x24] sm:$0xf]
        %v693 = vld [vmem:[%s310 + $0x28] sm:$0xf]
        %v694 = vld [vmem:[%s310 + $0x2c] sm:$0xf]
        %v695 = vld [vmem:[%s310 + $0x30] sm:$0xf]
        %v696 = vld [vmem:[%s310 + $0x34] sm:$0xf]
        %v697 = vld [vmem:[%s310 + $0x38] sm:$0xf]
        %v698 = vld [vmem:[%s310 + $0x3c] sm:$0xf]
        %s699 = sshra.s32 %s666, 3
        %s700 = sand.u32 %s666, 7
        %s701 = smul.addr %s699, 4
        %s702 = scalar_lea.vmem [#allocation2], %s701
        %v703 = vld [vmem:[%s702] sm:$0xf]
        %v704 = vld [vmem:[%s702 + $0x4] sm:$0xf]
        %v705 = vld [vmem:[%s702 + $0x8] sm:$0xf]
        %v706 = vld [vmem:[%s702 + $0xc] sm:$0xf]
        %v707 = vld [vmem:[%s702 + $0x10] sm:$0xf]
        %v708 = vld [vmem:[%s702 + $0x14] sm:$0xf]
        %v709 = vld [vmem:[%s702 + $0x18] sm:$0xf]
        %v710 = vld [vmem:[%s702 + $0x1c] sm:$0xf]
        %v711 = vld [vmem:[%s702 + $0x20] sm:$0xf]
        %v712 = vld [vmem:[%s702 + $0x24] sm:$0xf]
        %v713 = vld [vmem:[%s702 + $0x28] sm:$0xf]
        %v714 = vld [vmem:[%s702 + $0x2c] sm:$0xf]
        %v715 = vld [vmem:[%s702 + $0x30] sm:$0xf]
        %v716 = vld [vmem:[%s702 + $0x34] sm:$0xf]
        %v717 = vld [vmem:[%s702 + $0x38] sm:$0xf]
        %v718 = vld [vmem:[%s702 + $0x3c] sm:$0xf]
        %v735 = vunpack.c.l.b16 %v683
        %v736 = vunpack.c.l.b16 %v684
        %v737 = vunpack.c.l.b16 %v685
        %v738 = vunpack.c.l.b16 %v686
        %v739 = vunpack.c.l.b16 %v687
        %v740 = vunpack.c.l.b16 %v688
        %v741 = vunpack.c.l.b16 %v689
        %v742 = vunpack.c.l.b16 %v690
        %v743 = vunpack.c.l.b16 %v691
        %v744 = vunpack.c.l.b16 %v692
        %v745 = vunpack.c.l.b16 %v693
        %v746 = vunpack.c.l.b16 %v694
        %v747 = vunpack.c.l.b16 %v695
        %v748 = vunpack.c.l.b16 %v696
        %v749 = vunpack.c.l.b16 %v697
        %v750 = vunpack.c.l.b16 %v698
        %v751 = vpack.c.b16 %v736, %v735
        %v752 = vpack.c.b16 %v738, %v737
        %v753 = vpack.c.b16 %v740, %v739
        %v754 = vpack.c.b16 %v742, %v741
        %v755 = vpack.c.b16 %v744, %v743
        %v756 = vpack.c.b16 %v746, %v745
        %v757 = vpack.c.b16 %v748, %v747
        %v758 = vpack.c.b16 %v750, %v749
        %v783 = vunpack.c.l.b16 %v703
        %v784 = vunpack.c.l.b16 %v704
        %v785 = vunpack.c.l.b16 %v705
        %v786 = vunpack.c.l.b16 %v706
        %v787 = vunpack.c.l.b16 %v707
        %v788 = vunpack.c.l.b16 %v708
        %v789 = vunpack.c.l.b16 %v709
        %v790 = vunpack.c.l.b16 %v710
        %v791 = vunpack.c.l.b16 %v711
        %v792 = vunpack.c.l.b16 %v712
        %v793 = vunpack.c.l.b16 %v713
        %v794 = vunpack.c.l.b16 %v714
        %v795 = vunpack.c.l.b16 %v715
        %v796 = vunpack.c.l.b16 %v716
        %v797 = vunpack.c.l.b16 %v717
        %v798 = vunpack.c.l.b16 %v718
        %v799 = vpack.c.b16 %v784, %v783
        %v800 = vpack.c.b16 %v786, %v785
        %v801 = vpack.c.b16 %v788, %v787
        %v802 = vpack.c.b16 %v790, %v789
        %v803 = vpack.c.b16 %v792, %v791
        %v804 = vpack.c.b16 %v794, %v793
        %v805 = vpack.c.b16 %v796, %v795
        %v806 = vpack.c.b16 %v798, %v797
        %815 = vmatpush.bf16.msra.mxu0 %v806
        %816 = vmatpush.bf16.msra.mxu0 %v805
        %817 = vmatpush.bf16.msra.mxu0 %v804
        %818 = vmatpush.bf16.msra.mxu0 %v803
        %819 = vmatpush.bf16.msra.mxu0 %v802
        %820 = vmatpush.bf16.msra.mxu0 %v801
        %821 = vmatpush.bf16.msra.mxu0 %v800
        %822 = vmatpush.bf16.msra.mxu0 %v799
        %823 = vmatmul.bf16.gmra.mxu0 %v751
        %v824 = vpop.f32.mrf.mxu0
        %v825 = vadd.f32 0.0, %v824
        %v826 = vpop.f32.mrf.mxu0
        %v827 = vadd.f32 0.0, %v826
        %828 = vmatmul.bf16.gmra.mxu0 %v752
        %v829 = vpop.f32.mrf.mxu0
        %v830 = vadd.f32 0.0, %v829
        %v831 = vpop.f32.mrf.mxu0
        %v832 = vadd.f32 0.0, %v831
        %833 = vmatmul.bf16.gmra.mxu0 %v753
        %v834 = vpop.f32.mrf.mxu0
        %v835 = vadd.f32 0.0, %v834
        %v836 = vpop.f32.mrf.mxu0
        %v837 = vadd.f32 0.0, %v836
        %838 = vmatmul.bf16.gmra.mxu0 %v754
        %v839 = vpop.f32.mrf.mxu0
        %v840 = vadd.f32 0.0, %v839
        %v841 = vpop.f32.mrf.mxu0
        %v842 = vadd.f32 0.0, %v841
        %843 = vmatmul.bf16.gmra.mxu0 %v755
        %v844 = vpop.f32.mrf.mxu0
        %v845 = vadd.f32 0.0, %v844
        %v846 = vpop.f32.mrf.mxu0
        %v847 = vadd.f32 0.0, %v846
        %848 = vmatmul.bf16.gmra.mxu0 %v756
        %v849 = vpop.f32.mrf.mxu0
        %v850 = vadd.f32 0.0, %v849
        %v851 = vpop.f32.mrf.mxu0
        %v852 = vadd.f32 0.0, %v851
        %853 = vmatmul.bf16.gmra.mxu0 %v757
        %v854 = vpop.f32.mrf.mxu0
        %v855 = vadd.f32 0.0, %v854
        %v856 = vpop.f32.mrf.mxu0
        %v857 = vadd.f32 0.0, %v856
        %858 = vmatmul.bf16.gmra.mxu0 %v758
        %v859 = vpop.f32.mrf.mxu0
        %v860 = vadd.f32 0.0, %v859
        %v861 = vpop.f32.mrf.mxu0
        %v862 = vadd.f32 0.0, %v861
        %863 = vdwg.mxu0
        %v864 = vadd.f32 %v667, %v825
        %v865 = vadd.f32 %v668, %v827
        %v866 = vadd.f32 %v669, %v830
        %v867 = vadd.f32 %v670, %v832
        %v868 = vadd.f32 %v671, %v835
        %v869 = vadd.f32 %v672, %v837
        %v870 = vadd.f32 %v673, %v840
        %v871 = vadd.f32 %v674, %v842
        %v872 = vadd.f32 %v675, %v845
        %v873 = vadd.f32 %v676, %v847
        %v874 = vadd.f32 %v677, %v850
        %v875 = vadd.f32 %v678, %v852
        %v876 = vadd.f32 %v679, %v855
        %v877 = vadd.f32 %v680, %v857
        %v878 = vadd.f32 %v681, %v860
        %v879 = vadd.f32 %v682, %v862
        %880 = vst [vmem:[#allocation3] sm:$0xff] %v864
        %881 = vst [vmem:[#allocation3 + $0x8] sm:$0xff] %v865
        %882 = vst [vmem:[#allocation3 + $0x10] sm:$0xff] %v866
        %883 = vst [vmem:[#allocation3 + $0x18] sm:$0xff] %v867
        %884 = vst [vmem:[#allocation3 + $0x20] sm:$0xff] %v868
        %885 = vst [vmem:[#allocation3 + $0x28] sm:$0xff] %v869
        %886 = vst [vmem:[#allocation3 + $0x30] sm:$0xff] %v870
        %887 = vst [vmem:[#allocation3 + $0x38] sm:$0xff] %v871
        %888 = vst [vmem:[#allocation3 + $0x40] sm:$0xff] %v872
        %889 = vst [vmem:[#allocation3 + $0x48] sm:$0xff] %v873
        %890 = vst [vmem:[#allocation3 + $0x50] sm:$0xff] %v874
        %891 = vst [vmem:[#allocation3 + $0x58] sm:$0xff] %v875
        %892 = vst [vmem:[#allocation3 + $0x60] sm:$0xff] %v876
        %893 = vst [vmem:[#allocation3 + $0x68] sm:$0xff] %v877
        %894 = vst [vmem:[#allocation3 + $0x70] sm:$0xff] %v878
        %895 = vst [vmem:[#allocation3 + $0x78] sm:$0xff] %v879
        %p896 = scmp.eq.s32.totalorder %s22, 1
        // Predicated region
        $region90: #{gcn_forward.1} parent=72 // pred_check
          %p897 = pneg %p896
        $region91: #{gcn_forward.1} parent=72 // pred_check_branch
          %899 = sbr.rel (%p897) target = $region93
        $region92: #{gcn_forward.1} parent=72 // pred_region
          %v900 = vld [vmem:[#allocation3] sm:$0xff]
          %v901 = vld [vmem:[#allocation3 + $0x8] sm:$0xff]
          %v902 = vld [vmem:[#allocation3 + $0x10] sm:$0xff]
          %v903 = vld [vmem:[#allocation3 + $0x18] sm:$0xff]
          %v904 = vld [vmem:[#allocation3 + $0x20] sm:$0xff]
          %v905 = vld [vmem:[#allocation3 + $0x28] sm:$0xff]
          %v906 = vld [vmem:[#allocation3 + $0x30] sm:$0xff]
          %v907 = vld [vmem:[#allocation3 + $0x38] sm:$0xff]
          %v908 = vld [vmem:[#allocation3 + $0x40] sm:$0xff]
          %v909 = vld [vmem:[#allocation3 + $0x48] sm:$0xff]
          %v910 = vld [vmem:[#allocation3 + $0x50] sm:$0xff]
          %v911 = vld [vmem:[#allocation3 + $0x58] sm:$0xff]
          %v912 = vld [vmem:[#allocation3 + $0x60] sm:$0xff]
          %v913 = vld [vmem:[#allocation3 + $0x68] sm:$0xff]
          %v914 = vld [vmem:[#allocation3 + $0x70] sm:$0xff]
          %v915 = vld [vmem:[#allocation3 + $0x78] sm:$0xff]
          %v916 = vld [vmem:[%s344] sm:$0x1]
          %v918 = vperm.slane %v916, 0
          %v920 = vadd.f32 %v900, %v918
          %v921 = vadd.f32 %v901, %v918
          %v922 = vadd.f32 %v902, %v918
          %v923 = vadd.f32 %v903, %v918
          %v924 = vadd.f32 %v904, %v918
          %v925 = vadd.f32 %v905, %v918
          %v926 = vadd.f32 %v906, %v918
          %v927 = vadd.f32 %v907, %v918
          %v928 = vadd.f32 %v908, %v918
          %v929 = vadd.f32 %v909, %v918
          %v930 = vadd.f32 %v910, %v918
          %v931 = vadd.f32 %v911, %v918
          %v932 = vadd.f32 %v912, %v918
          %v933 = vadd.f32 %v913, %v918
          %v934 = vadd.f32 %v914, %v918
          %v935 = vadd.f32 %v915, %v918
          %p936 = scmp.eq.s32.totalorder %s20, 2
          %v937 = vmax.f32 %v920, 0.0
          %v938 = vmax.f32 %v921, 0.0
          %v939 = vmax.f32 %v922, 0.0
          %v940 = vmax.f32 %v923, 0.0
          %v941 = vmax.f32 %v924, 0.0
          %v942 = vmax.f32 %v925, 0.0
          %v943 = vmax.f32 %v926, 0.0
          %v944 = vmax.f32 %v927, 0.0
          %v945 = vmax.f32 %v928, 0.0
          %v946 = vmax.f32 %v929, 0.0
          %v947 = vmax.f32 %v930, 0.0
          %v948 = vmax.f32 %v931, 0.0
          %v949 = vmax.f32 %v932, 0.0
          %v950 = vmax.f32 %v933, 0.0
          %v951 = vmax.f32 %v934, 0.0
          %v952 = vmax.f32 %v935, 0.0
          %s953 = scalar_select %p936, 1, 0
          %v954 = vstv %s953
          %vm955 = vcmp.eq.s32.totalorder %v954, 1
          %v956 = vsel %vm955, %v920, %v937
          %v957 = vsel %vm955, %v921, %v938
          %v958 = vsel %vm955, %v922, %v939
          %v959 = vsel %vm955, %v923, %v940
          %v960 = vsel %vm955, %v924, %v941
          %v961 = vsel %vm955, %v925, %v942
          %v962 = vsel %vm955, %v926, %v943
          %v963 = vsel %vm955, %v927, %v944
          %v964 = vsel %vm955, %v928, %v945
          %v965 = vsel %vm955, %v929, %v946
          %v966 = vsel %vm955, %v930, %v947
          %v967 = vsel %vm955, %v931, %v948
          %v968 = vsel %vm955, %v932, %v949
          %v969 = vsel %vm955, %v933, %v950
          %v970 = vsel %vm955, %v934, %v951
          %v971 = vsel %vm955, %v935, %v952
          %s972 = smul.u32 %s21, 128
          %s973 = scalar_lea.vmem %s4, %s972
          %974 = vst [vmem:[%s973] sm:$0xff] %v956
          %975 = vst [vmem:[%s973 + $0x8] sm:$0xff] %v957
          %976 = vst [vmem:[%s973 + $0x10] sm:$0xff] %v958
          %977 = vst [vmem:[%s973 + $0x18] sm:$0xff] %v959
          %978 = vst [vmem:[%s973 + $0x20] sm:$0xff] %v960
          %979 = vst [vmem:[%s973 + $0x28] sm:$0xff] %v961
          %980 = vst [vmem:[%s973 + $0x30] sm:$0xff] %v962
          %981 = vst [vmem:[%s973 + $0x38] sm:$0xff] %v963
          %982 = vst [vmem:[%s973 + $0x40] sm:$0xff] %v964
          %983 = vst [vmem:[%s973 + $0x48] sm:$0xff] %v965
          %984 = vst [vmem:[%s973 + $0x50] sm:$0xff] %v966
          %985 = vst [vmem:[%s973 + $0x58] sm:$0xff] %v967
          %986 = vst [vmem:[%s973 + $0x60] sm:$0xff] %v968
          %987 = vst [vmem:[%s973 + $0x68] sm:$0xff] %v969
          %988 = vst [vmem:[%s973 + $0x70] sm:$0xff] %v970
          %989 = vst [vmem:[%s973 + $0x78] sm:$0xff] %v971
        $region93: #{gcn_forward.1} parent=72 // pred_fallthru
          _
        // Predicated region
        $region94: #{gcn_forward.1} parent=72 // pred_check
          %p990 = pneg %p148
        $region95: #{gcn_forward.1} parent=72 // pred_check_branch
          %992 = sbr.rel (%p990) target = $region97
        $region96: #{gcn_forward.1} parent=72 // pred_region
          _
        $region97: #{gcn_forward.1} parent=72 // pred_fallthru
          _
        // Predicated region
        $region98: #{gcn_forward.1} parent=72 // pred_check
          %p993 = pneg %p148
        $region99: #{gcn_forward.1} parent=72 // pred_check_branch
          %995 = sbr.rel (%p993) target = $region101
        $region100: #{gcn_forward.1} parent=72 // pred_region
          _
        $region101: #{gcn_forward.1} parent=72 // pred_fallthru
          _
      $region73: #{gcn_forward.1} parent=5 // pred_fallthru
        _
      %p996 = scmp.le.s32.totalorder 2, %s10
      // Predicated region
      $region102: #{gcn_forward.1} parent=5 // pred_check
        %p997 = pneg %p996
      $region103: #{gcn_forward.1} parent=5 // pred_check_branch
        %999 = sbr.rel (%p997) target = $region105
      $region104: #{gcn_forward.1} parent=5 // pred_region
        %s1000 = ssub.s32 %s10, 2
      $region105: #{gcn_forward.1} parent=5 // pred_fallthru
        _
    $region6: #{gcn_forward.1} parent=1 // loop_footer
      %s14 = sadd.s32 1, %s10
    $region7: #{gcn_forward.1} parent=1 // loop_footer_branch
      %9 = sbr.rel target = $region3
    $region8: #{gcn_forward.1} parent=1 // loop_exit
      _

</llo_original>
